<compile_context>
chip_gen: v6e
topology: v6e:2x2x1
jax: 0.10.0
libtpu: 0.0.40
codegen_flags: <defaults>
</compile_context>

<pallas_src>
import functools

import jax
import jax.numpy as jnp
from jax import lax
from jax.experimental import pallas as pl
from jax.experimental.pallas import tpu as pltpu


def _round_up(x, m):
    return ((x + m - 1) // m) * m


def _pred_mask_kernel(x_ref, wb1_ref, wb2_ref, o_ref, *, chunk):
    # x_ref  : (C, TP)     f32  channels on sublanes, pixels on lanes
    # wb1_ref: (HID, C+1)  bf16 packed [w1^T | b1]
    # wb2_ref: (1, HID+1)  f32  packed [w2^T | b2]
    # o_ref  : (1, TP)     f32  lane-dense mask tile
    c = x_ref.shape[0]
    tp = x_ref.shape[1]
    hid = wb1_ref.shape[0]
    n_chunks = tp // chunk

    wb1 = wb1_ref[...]                                    # (HID, C+1) bf16
    wb2 = wb2_ref[...]                                    # (1, HID+1) f32
    w1 = wb1[:, :c]                                       # (HID, C)   bf16
    w2 = wb2[:, :hid]                                     # (1, HID)   f32
    # Hoist broadcasts out of the chunk loop (JAX does not CSE broadcast_in_dim).
    b1 = jnp.broadcast_to(wb1[:, c:c + 1].astype(jnp.float32), (hid, chunk))
    b2 = jnp.broadcast_to(wb2[:, hid:hid + 1], (1, chunk))

    def body(i, carry):
        start = pl.multiple_of(i * chunk, 128)
        # In-kernel cast: HBM traffic stays f32-read only, no separate cast op.
        xc = x_ref[:, pl.ds(start, chunk)].astype(jnp.bfloat16)   # (C, chunk)
        h = jnp.dot(w1, xc, preferred_element_type=jnp.float32)   # MXU, (HID, chunk)
        h = jnp.maximum(h + b1, 0.0)                              # bias + ReLU (VPU)
        logits = jnp.dot(w2, h, preferred_element_type=jnp.float32) + b2  # MXU
        # sigmoid = 1 / (1 + exp(-x)): exp + approx reciprocal on the EUP slot.
        o_ref[:, pl.ds(start, chunk)] = pl.reciprocal(
            1.0 + jnp.exp(-logits), approx=True)
        return carry

    lax.fori_loop(0, n_chunks, body, 0, unroll=(n_chunks <= 8))


def _pred_mask_pallas(x, wb1, wb2):
    # x: (N, C, P) f32 ; wb1: (HID, C+1) bf16 ; wb2: (1, HID+1) f32
    n, c, p = x.shape
    hid = wb1.shape[0]

    chunk_cap = 1024            # lane chunk for the in-kernel compute loop
    tp_cap = 64 * 1024          # pixels per grid step; safe for v7x 64 MiB VMEM

    p128 = _round_up(p, 128)
    if p128 <= chunk_cap:
        chunk = p128
        tp = p128
    else:
        chunk = chunk_cap
        tp = min(_round_up(p128, chunk), tp_cap)
        # Keep >= ~4 grid steps so both v7x TensorCores get work and the
        # pipeline reaches a steady state on small-batch inputs.
        while tp > chunk and n * pl.cdiv(p, tp) < 4:
            tp = max(chunk, _round_up(tp // 2, chunk))

    grid = (n, pl.cdiv(p, tp))

    cost = pl.CostEstimate(
        flops=int(2 * n * p * hid * (c + 2)),
        transcendentals=int(2 * n * p),
        bytes_accessed=int(n * p * (c + 1) * 4 + wb1.size * 2 + wb2.size * 4),
    )

    kernel = functools.partial(_pred_mask_kernel, chunk=chunk)

    return pl.pallas_call(
        kernel,
        out_shape=jax.ShapeDtypeStruct((n, 1, p), jnp.float32),
        grid_spec=pltpu.PrefetchScalarGridSpec(
            num_scalar_prefetch=0,
            grid=grid,
            in_specs=[
                pl.BlockSpec((None, c, tp), lambda i, j: (i, 0, j)),   # x tile
                pl.BlockSpec((hid, c + 1), lambda i, j: (0, 0)),       # [w1|b1] resident
                pl.BlockSpec((1, hid + 1), lambda i, j: (0, 0)),       # [w2|b2] resident
            ],
            out_specs=pl.BlockSpec((None, 1, tp), lambda i, j: (i, 0, j)),
        ),
        compiler_params=pltpu.CompilerParams(
            dimension_semantics=("parallel", "parallel"),
            vmem_limit_bytes=48 * 1024 * 1024,
        ),
        cost_estimate=cost,
    )(x, wb1, wb2)


class SyntheticForensicModel:
    """Deterministic stand-in for the wrapped model; returns {'pred_mask': ...}."""
    # TODO(synk): the real wrapped model is injected at runtime in ForensicHub;
    # this synthetic per-pixel MLP head stands in for it.

    def __init__(self, in_channels=4, hidden=32):
        k1, k2 = jax.random.split(jax.random.PRNGKey(42))
        self.w1 = (jax.random.normal(k1, (in_channels, hidden), jnp.float32)
                   * (1.0 / jnp.sqrt(in_channels)))
        self.b1 = jnp.zeros((hidden,), jnp.float32)
        self.w2 = (jax.random.normal(k2, (hidden, 1), jnp.float32)
                   * (1.0 / jnp.sqrt(hidden)))
        self.b2 = jnp.zeros((1,), jnp.float32)
        # Kernel-side packed layouts (channels-first, consolidated operands).
        self.wb1 = jnp.concatenate(
            [self.w1.T, self.b1.reshape(hidden, 1)], axis=1).astype(jnp.bfloat16)
        self.wb2 = jnp.concatenate(
            [self.w2.T, self.b2.reshape(1, 1)], axis=1).astype(jnp.float32)

    def __call__(self, *, image):
        # image: NCHW float32
        n, c, h, w = image.shape
        p = h * w
        # NCHW -> (N, C, H*W): pure reshape, no transpose, no dtype cast
        # (bf16 cast happens inside the kernel; HBM keeps a single f32 copy).
        x = image.reshape(n, c, p)
        mask = _pred_mask_pallas(x, self.wb1, self.wb2)        # (N, 1, P) f32
        return {"pred_mask": mask.reshape(n, 1, h, w)}


class OutputWrapper:
    """JAX/Pallas equivalent of the PyTorch OutputWrapper module."""

    def __init__(self, model):
        self.model = model

    def __call__(self, x):
        # Exactly mirrors: return self.model(**x)['pred_mask']
        return self.model(**x)["pred_mask"]


if __name__ == "__main__":
    key = jax.random.PRNGKey(0)
    image = jax.random.normal(key, (2, 4, 16, 16), jnp.float32)
    x = {"image": image}

    model = SyntheticForensicModel(in_channels=4, hidden=32)
    wrapper = OutputWrapper(model)
    pred_mask = jax.block_until_ready(wrapper(x))

    assert pred_mask.shape == (2, 1, 16, 16), pred_mask.shape
    assert pred_mask.dtype == jnp.float32

    # Pure-JAX reference mirroring the kernel math (bf16 first matmul, f32 rest).
    xf = image.reshape(2, 4, -1)                                  # (N, C, P) f32
    w1 = model.wb1[:, :4]                                         # (HID, C) bf16
    b1 = model.wb1[:, 4:5].astype(jnp.float32)                    # (HID, 1)
    w2 = model.wb2[:, :32]                                        # (1, HID)
    b2 = model.wb2[:, 32:33]                                      # (1, 1)
    h = jnp.maximum(
        jnp.einsum("hc,ncp->nhp", w1, xf.astype(jnp.bfloat16),
                   preferred_element_type=jnp.float32) + b1[None], 0.0)
    logits = jnp.einsum("oh,nhp->nop", w2, h) + b2[None]
    ref = jax.nn.sigmoid(logits).reshape(2, 1, 16, 16)
    max_err = float(jnp.max(jnp.abs(pred_mask - ref)))
    assert jnp.allclose(pred_mask, ref, atol=1e-2, rtol=1e-2), max_err

    print("KERNEL_OK")
</pallas_src>

<mosaic_0001>
module attributes {stable_mosaic.version = 11 : i64} {
  func.func @_pred_mask_kernel(%arg0: i32, %arg1: i32, %arg2: memref<1x4x256xf32, #tpu.memory_space<vmem>>, %arg3: memref<32x5xbf16, #tpu.memory_space<vmem>>, %arg4: memref<1x33xf32, #tpu.memory_space<vmem>>, %arg5: memref<1x1x256xf32, #tpu.memory_space<vmem>>) attributes {dimension_semantics = [#tpu.dimension_semantics<parallel>, #tpu.dimension_semantics<parallel>], iteration_bounds = array<i64: 2, 1>, scalar_prefetch = 0 : i64, scratch_operands = 0 : i64, tpu.core_type = #tpu.core_type<tc>, window_params = [{transform_indices = @transform_0, window_bounds = array<i64: 1, 4, 256>}, {pipeline_mode = #tpu.pipeline_mode<synchronous>, transform_indices = @transform_1, window_bounds = array<i64: 32, 5>}, {pipeline_mode = #tpu.pipeline_mode<synchronous>, transform_indices = @transform_2, window_bounds = array<i64: 1, 33>}, {transform_indices = @transform_3, window_bounds = array<i64: 1, 1, 256>}]} {
    %c0 = arith.constant 0 : index
    %c0_0 = arith.constant 0 : index
    %0 = vector.load %arg3[%c0, %c0_0] : memref<32x5xbf16, #tpu.memory_space<vmem>>, vector<32x5xbf16>
    %c0_1 = arith.constant 0 : index
    %c0_2 = arith.constant 0 : index
    %1 = vector.load %arg4[%c0_1, %c0_2] : memref<1x33xf32, #tpu.memory_space<vmem>>, vector<1x33xf32>
    %2 = vector.extract_strided_slice %0 {offsets = [0, 0], sizes = [32, 4], strides = [1, 1]} : vector<32x5xbf16> to vector<32x4xbf16>
    %3 = vector.extract_strided_slice %1 {offsets = [0, 0], sizes = [1, 32], strides = [1, 1]} : vector<1x33xf32> to vector<1x32xf32>
    %4 = vector.extract_strided_slice %0 {offsets = [0, 4], sizes = [32, 1], strides = [1, 1]} : vector<32x5xbf16> to vector<32x1xbf16>
    %5 = arith.extf %4 : vector<32x1xbf16> to vector<32x1xf32>
    %6 = vector.shape_cast %5 : vector<32x1xf32> to vector<32x1xf32>
    %7 = vector.broadcast %6 : vector<32x1xf32> to vector<32x256xf32>
    %8 = vector.extract_strided_slice %1 {offsets = [0, 32], sizes = [1, 1], strides = [1, 1]} : vector<1x33xf32> to vector<1x1xf32>
    %9 = vector.shape_cast %8 : vector<1x1xf32> to vector<1x1xf32>
    %10 = vector.broadcast %9 : vector<1x1xf32> to vector<1x256xf32>
    %c0_i32 = arith.constant 0 : i32
    %c256_i32 = arith.constant 256 : i32
    %11 = arith.muli %c0_i32, %c256_i32 : i32
    %12 = tpu.assume_multiple %11, 128 : i32
    %c0_3 = arith.constant 0 : index
    %c0_4 = arith.constant 0 : index
    %13 = arith.index_cast %12 : i32 to index
    %14 = vector.load %arg2[%c0_3, %c0_4, %13] : memref<1x4x256xf32, #tpu.memory_space<vmem>>, vector<1x4x256xf32>
    %15 = vector.shape_cast %14 : vector<1x4x256xf32> to vector<4x256xf32>
    %16 = arith.truncf %15 : vector<4x256xf32> to vector<4x256xbf16>
    %cst = arith.constant dense<0.000000e+00> : vector<32x256xf32>
    %17 = tpu.matmul %2, %16, %cst {dimension_numbers = #tpu.dot_dimension_numbers<[1], [0], [0], [1], [0, 0, 1, 1], [], []>} : vector<32x4xbf16>, vector<4x256xbf16>, vector<32x256xf32> -> vector<32x256xf32>
    %18 = arith.addf %17, %7 : vector<32x256xf32>
    %cst_5 = arith.constant 0.000000e+00 : f32
    %19 = vector.broadcast %cst_5 : f32 to vector<32x256xf32>
    %20 = arith.maximumf %18, %19 : vector<32x256xf32>
    %cst_6 = arith.constant dense<0.000000e+00> : vector<1x256xf32>
    %21 = tpu.matmul %3, %20, %cst_6 {dimension_numbers = #tpu.dot_dimension_numbers<[1], [0], [0], [1], [0, 0, 1, 1], [], []>} : vector<1x32xf32>, vector<32x256xf32>, vector<1x256xf32> -> vector<1x256xf32>
    %22 = arith.addf %21, %10 : vector<1x256xf32>
    %cst_7 = arith.constant 0.000000e+00 : f32
    %23 = vector.broadcast %cst_7 : f32 to vector<1x256xf32>
    %24 = arith.subf %23, %22 : vector<1x256xf32>
    %25 = math.exp %24 : vector<1x256xf32>
    %cst_8 = arith.constant 1.000000e+00 : f32
    %26 = vector.broadcast %cst_8 : f32 to vector<1x256xf32>
    %27 = arith.addf %26, %25 : vector<1x256xf32>
    %28 = tpu.reciprocal %27 {approx = true} : vector<1x256xf32> -> vector<1x256xf32>
    %c0_9 = arith.constant 0 : index
    %c0_10 = arith.constant 0 : index
    %29 = arith.index_cast %12 : i32 to index
    %30 = vector.load %arg5[%c0_9, %c0_10, %29] : memref<1x1x256xf32, #tpu.memory_space<vmem>>, vector<1x1x256xf32>
    %31 = vector.shape_cast %30 : vector<1x1x256xf32> to vector<1x256xf32>
    %32 = vector.shape_cast %28 : vector<1x256xf32> to vector<1x1x256xf32>
    tpu.vector_store %arg5[%c0_9, %c0_10, %29], %32 {strides = array<i32>} : memref<1x1x256xf32, #tpu.memory_space<vmem>>, vector<1x1x256xf32>,
    %c1_i32 = arith.constant 1 : i32
    return
  }
  func.func @transform_0(%arg0: i32, %arg1: i32) -> (i32, i32, i32) {
    %c0_i32 = arith.constant 0 : i32
    %c0_i32_0 = arith.constant 0 : i32
    return %arg0, %c0_i32, %arg1 : i32, i32, i32
  }
  func.func @transform_1(%arg0: i32, %arg1: i32) -> (i32, i32) {
    %c0_i32 = arith.constant 0 : i32
    %c0_i32_0 = arith.constant 0 : i32
    %c0_i32_1 = arith.constant 0 : i32
    return %c0_i32, %c0_i32_0 : i32, i32
  }
  func.func @transform_2(%arg0: i32, %arg1: i32) -> (i32, i32) {
    %c0_i32 = arith.constant 0 : i32
    %c0_i32_0 = arith.constant 0 : i32
    %c0_i32_1 = arith.constant 0 : i32
    return %c0_i32, %c0_i32_0 : i32, i32
  }
  func.func @transform_3(%arg0: i32, %arg1: i32) -> (i32, i32, i32) {
    %c0_i32 = arith.constant 0 : i32
    %c0_i32_0 = arith.constant 0 : i32
    return %arg0, %c0_i32, %arg1 : i32, i32, i32
  }
}

</mosaic_0001>

<llo_original>
// kernel: tpu_custom_call.1
$region0: #{tpu_custom_call.1}
  #allocation0 [shape = 'u32[]', space=smem, size = 0x4, offset = 0x4, fixed_abs, tag = 'smem constant byte address 0x4 - core index']
  #allocation1 [shape = 'u32[144,128]{1,0:T(1,128)}', space=vmem, size = 0x12000, scoped, tag = 'internal scratch']
  %s0 = inlined_call_operand.vmem [shape: f32[2,4,256], index: 0, kind: input, shape index: {}]
  %s1 = inlined_call_operand.vmem [shape: bf16[32,5], index: 1, kind: input, shape index: {}]
  %s2 = inlined_call_operand.vmem [shape: f32[1,33], index: 2, kind: input, shape index: {}]
  %s3 = inlined_call_operand.hbm [shape: f32[2,1,256], index: 3, kind: output, shape index: {}]
  %s4 = sld [smem:[#allocation0]]
  $region45: #{tpu_custom_call.1} parent=0
    _
  %s6 = ssub.s32 1, %s4
  %s7 = scalar_select 0, %s6, %s4
  $region1: #{tpu_custom_call.1} parent=0
    #allocation2 [shape = 'u8[2048]{0}', space=vmem, size = 0x800, scoped, tag = 'output window, operand 0']
    #allocation3 [shape = 's32[2]{0}', space=sflag, size = 0x8, scoped, tag = 'scoped memory for tpu_custom_call.1']
    %8 = vsyncpa [#allocation3], 0
    %s9 = scalar_lea.sflag [#allocation3], 1
    %10 = vsyncpa %s9, 0
    loop: start=0, step=1, limit=4
    $region2: #{tpu_custom_call.1} parent=1 // loop_pre_header
      _
    $region3: #{tpu_custom_call.1} parent=1 // loop_header
      %s12 = sphi 0, %s16
      %p13 = scmp.ge.s32.totalorder %s12, 4
      %s19 = sphi 0, %s31
      %s20 = sphi 0, %s27
      %s21 = sphi 0, %s19
      %s22 = sphi 0, %s20
      %s23 = sphi 0, %s21
      %s24 = sphi 0, %s22
      %s36 = sphi 0, %s38
      %s39 = sphi 0, %s36
      %s40 = sphi 0, %s39
      %s56 = sphi 0, %s40
      %s60 = sphi 0, %s60
      %s62 = sphi 0, %s60
      %s63 = sphi 0, %s62
      %s77 = sphi 0, %s63
      %s81 = sphi 0, %s81
      %s83 = sphi 0, %s81
      %s84 = sphi 0, %s83
      %s98 = sphi 0, %s84
      %s106 = sphi 0, %s108
      %s109 = sphi 0, %s106
      %s110 = sphi 0, %s109
      %s126 = sphi 0, %s110
    $region4: #{tpu_custom_call.1} parent=1 // loop_header_branch
      %15 = sbr.rel (%p13) target = $region8
    $region5: #{tpu_custom_call.1} parent=1 // loop_body
      %s17 = ssub.s32 %s12, 1
      %s18 = ssub.s32 %s12, 2
      %s25 = sadd.s32 1, %s20
      %p26 = scmp.ge.s32.totalorder %s25, 1
      %s27 = scalar_select %p26, 0, %s25
      %s28 = sadd.s32 1, %s19
      %s29 = scalar_select %p26, %s28, %s19
      %p30 = scmp.ge.s32.totalorder %s29, 2
      %s31 = scalar_select %p30, 0, %s29
      %s32 = ssub.s32 %s19, %s31
      %s33 = ssub.s32 %s20, %s27
      %s34 = sor.u32 %s32, %s33
      %p35 = scmp.eq.s32.totalorder %s34, 0
      %s37 = sadd.s32 %s36, 1
      %s38 = scalar_select %p35, %s36, %s37
      %p41 = pneg %p35
      %p42 = scmp.eq.s32.totalorder %s12, 1
      %p43 = por %p41, %p42
      %p44 = scmp.ne.s32.totalorder %s36, %s39
      %p45 = scmp.eq.s32.totalorder %s12, 0
      %p46 = por %p44, %p45
      %p47 = scmp.ne.s32.totalorder %s36, %s39
      %p48 = scmp.eq.s32.totalorder %s17, 1
      %p49 = por %p47, %p48
      %p50 = scmp.ne.s32.totalorder %s39, %s40
      %p51 = scmp.eq.s32.totalorder %s17, 0
      %p52 = por %p50, %p51
      %p53 = scmp.ne.s32.totalorder %s39, %s40
      %p54 = scmp.eq.s32.totalorder %s18, 1
      %p55 = por %p53, %p54
      %p57 = scmp.ne.s32.totalorder %s40, %s56
      %p58 = scmp.eq.s32.totalorder %s18, 0
      %p59 = por %p57, %p58
      %s61 = sadd.s32 %s60, 1
      %p64 = scmp.eq.s32.totalorder %s12, 1
      %p65 = scmp.ne.s32.totalorder %s60, %s62
      %p66 = scmp.eq.s32.totalorder %s12, 0
      %p67 = por %p65, %p66
      %p68 = scmp.ne.s32.totalorder %s60, %s62
      %p69 = scmp.eq.s32.totalorder %s17, 1
      %p70 = por %p68, %p69
      %p71 = scmp.ne.s32.totalorder %s62, %s63
      %p72 = scmp.eq.s32.totalorder %s17, 0
      %p73 = por %p71, %p72
      %p74 = scmp.ne.s32.totalorder %s62, %s63
      %p75 = scmp.eq.s32.totalorder %s18, 1
      %p76 = por %p74, %p75
      %p78 = scmp.ne.s32.totalorder %s63, %s77
      %p79 = scmp.eq.s32.totalorder %s18, 0
      %p80 = por %p78, %p79
      %s82 = sadd.s32 %s81, 1
      %p85 = scmp.eq.s32.totalorder %s12, 1
      %p86 = scmp.ne.s32.totalorder %s81, %s83
      %p87 = scmp.eq.s32.totalorder %s12, 0
      %p88 = por %p86, %p87
      %p89 = scmp.ne.s32.totalorder %s81, %s83
      %p90 = scmp.eq.s32.totalorder %s17, 1
      %p91 = por %p89, %p90
      %p92 = scmp.ne.s32.totalorder %s83, %s84
      %p93 = scmp.eq.s32.totalorder %s17, 0
      %p94 = por %p92, %p93
      %p95 = scmp.ne.s32.totalorder %s83, %s84
      %p96 = scmp.eq.s32.totalorder %s18, 1
      %p97 = por %p95, %p96
      %p99 = scmp.ne.s32.totalorder %s84, %s98
      %p100 = scmp.eq.s32.totalorder %s18, 0
      %p101 = por %p99, %p100
      %s102 = ssub.s32 %s19, %s31
      %s103 = ssub.s32 %s20, %s27
      %s104 = sor.u32 %s102, %s103
      %p105 = scmp.eq.s32.totalorder %s104, 0
      %s107 = sadd.s32 %s106, 1
      %s108 = scalar_select %p105, %s106, %s107
      %p111 = pneg %p105
      %p112 = scmp.eq.s32.totalorder %s12, 1
      %p113 = por %p111, %p112
      %p114 = scmp.ne.s32.totalorder %s106, %s109
      %p115 = scmp.eq.s32.totalorder %s12, 0
      %p116 = por %p114, %p115
      %p117 = scmp.ne.s32.totalorder %s106, %s109
      %p118 = scmp.eq.s32.totalorder %s17, 1
      %p119 = por %p117, %p118
      %p120 = scmp.ne.s32.totalorder %s109, %s110
      %p121 = scmp.eq.s32.totalorder %s17, 0
      %p122 = por %p120, %p121
      %p123 = scmp.ne.s32.totalorder %s109, %s110
      %p124 = scmp.eq.s32.totalorder %s18, 1
      %p125 = por %p123, %p124
      %p127 = scmp.ne.s32.totalorder %s110, %s126
      %p128 = scmp.eq.s32.totalorder %s18, 0
      %p129 = por %p127, %p128
      %p130 = scmp.le.s32.totalorder 1, %s12
      %p131 = scmp.lt.s32.totalorder %s12, 3
      %p132 = pnand %p130, %p131
      %p133 = pneg %p132
      // Predicated region
      $region9: #{tpu_custom_call.1} parent=5 // pred_check
        _
      $region10: #{tpu_custom_call.1} parent=5 // pred_check_branch
        %135 = sbr.rel (%p132) target = $region12
      $region11: #{tpu_custom_call.1} parent=5 // pred_region
        %s136 = ssub.s32 %s12, 1
        // Predicated region
        $region13: #{tpu_custom_call.1} parent=11 // pred_check
          %p137 = pneg %p73
        $region14: #{tpu_custom_call.1} parent=11 // pred_check_branch
          %139 = sbr.rel (%p137) target = $region16
        $region15: #{tpu_custom_call.1} parent=11 // pred_region
          _
        $region16: #{tpu_custom_call.1} parent=11 // pred_fallthru
          _
        // Predicated region
        $region17: #{tpu_custom_call.1} parent=11 // pred_check
          %p140 = pneg %p94
        $region18: #{tpu_custom_call.1} parent=11 // pred_check_branch
          %142 = sbr.rel (%p140) target = $region20
        $region19: #{tpu_custom_call.1} parent=11 // pred_region
          _
        $region20: #{tpu_custom_call.1} parent=11 // pred_fallthru
          _
      $region12: #{tpu_custom_call.1} parent=5 // pred_fallthru
        _
      %p143 = scmp.lt.s32.totalorder %s12, 2
      // Predicated region
      $region21: #{tpu_custom_call.1} parent=5 // pred_check
        %p144 = pneg %p143
      $region22: #{tpu_custom_call.1} parent=5 // pred_check_branch
        %146 = sbr.rel (%p144) target = $region24
      $region23: #{tpu_custom_call.1} parent=5 // pred_region
        // Predicated region
        $region25: #{tpu_custom_call.1} parent=23 // pred_check
          %p147 = pneg %p46
        $region26: #{tpu_custom_call.1} parent=23 // pred_check_branch
          %149 = sbr.rel (%p147) target = $region28
        $region27: #{tpu_custom_call.1} parent=23 // pred_region
          %s150 = smul.u32 2, %s20
          %p151 = scmp.lt.s32.totalorder %s19, 1
          %s152 = scalar_select %p151, %s19, 1
          %p153 = scmp.lt.s32.totalorder %s150, 1
          %s154 = scalar_select %p153, %s150, 1
          %s155 = smul.addr %s152, 2
          %s156 = sadd.s32 %s154, %s155
          %s157 = smul.addr %s156, 4
          %s158 = scalar_lea.vmem %s0, %s157
          %s159 = smul.u32 2, %s20
        $region28: #{tpu_custom_call.1} parent=23 // pred_fallthru
          _
      $region24: #{tpu_custom_call.1} parent=5 // pred_fallthru
        _
      %p160 = scmp.le.s32.totalorder 1, %s12
      %p161 = scmp.lt.s32.totalorder %s12, 3
      %p162 = pnand %p160, %p161
      %p163 = pneg %p162
      // Predicated region
      $region29: #{tpu_custom_call.1} parent=5 // pred_check
        _
      $region30: #{tpu_custom_call.1} parent=5 // pred_check_branch
        %165 = sbr.rel (%p162) target = $region32
      $region31: #{tpu_custom_call.1} parent=5 // pred_region
        %s166 = ssub.s32 %s12, 1
        %s167 = smul.u32 2, %s22
        %p168 = scmp.lt.s32.totalorder %s21, 1
        %s169 = scalar_select %p168, %s21, 1
        %p170 = scmp.lt.s32.totalorder %s167, 1
        %s171 = scalar_select %p170, %s167, 1
        %s172 = smul.addr %s169, 2
        %s173 = sadd.s32 %s171, %s172
        %s174 = smul.addr %s173, 4
        %s175 = scalar_lea.vmem %s0, %s174
        %p176 = pneg %p52
        %p177 = pneg %p49
        %p178 = pneg %p73
        %p179 = pneg %p70
        %p180 = pneg %p94
        %p181 = pneg %p91
        %p182 = pneg %p122
        %p183 = pneg %p119
        %s184 = sand.u32 %s109, 1
        %s185 = scalar_lea.sflag [#allocation3], %s184
        %s186 = sand.u32 %s109, 1
        %s187 = smul.addr %s186, 2
        %s188 = scalar_lea.vmem [#allocation2], %s187
        %s189 = smul.u32 2, %s22
        %p190 = scmp.lt.s32.totalorder %s21, 1
        %s191 = scalar_select %p190, %s21, 1
        %p192 = scmp.lt.s32.totalorder %s189, 1
        %s193 = scalar_select %p192, %s189, 1
        %s194 = smul.addr %s191, 2
        %s195 = sadd.s32 %s193, %s194
        %s196 = smul.addr %s195, 4
        %s197 = scalar_lea.vmem %s0, %s196
        %s198 = smul.u32 2, %s22
        %s199 = smul.u32 2, %s22
        %v201 = vld [vmem:[%s1] sm:$0xf]
        %v202 = vld [vmem:[%s1 + $0x4] sm:$0xf]
        %v203 = vld [vmem:[%s1 + $0x8] sm:$0xf]
        %v204 = vld [vmem:[%s1 + $0xc] sm:$0xf]
        %v205 = vld [vmem:[%s2] sm:$0x1]
        %v206 = vunpack.c.l.bf16 %v201
        %v207 = vunpack.c.l.bf16 %v202
        %v208 = vunpack.c.l.bf16 %v203
        %v209 = vunpack.c.l.bf16 %v204
        %211 = vset.pattern.permute.xlu0 4
        %212 = vperm.xlu0 %211, %v206
        %v213 = vpop.permute.xlu0 %212
        %216 = vset.pattern.permute.xlu0 4
        %217 = vperm.xlu0 %216, %v207
        %v218 = vpop.permute.xlu0 %217
        %221 = vset.pattern.permute.xlu0 4
        %222 = vperm.xlu0 %221, %v208
        %v223 = vpop.permute.xlu0 %222
        %226 = vset.pattern.permute.xlu0 4
        %227 = vperm.xlu0 %226, %v209
        %v228 = vpop.permute.xlu0 %227
        %231 = vset.pattern.permute.xlu0 32
        %232 = vperm.xlu0 %231, %v205
        %v233 = vpop.permute.xlu0 %232
        %v235 = vlaneseq
        %v236 = vshrl.u32 %v235, 7
        %v237 = vsub.s32 0, %v236
        %v238 = vrot.slane %v233, %v237
        %v239 = vld [vmem:[%s197] sm:$0xff]
        %v241 = vcombine.high %v239, %v239
        %v243 = vpack.c.bf16 %v239, %v239
        %v244 = vpack.c.bf16 %v241, %v241
        %v249 = vunpack.c.l.b16 %v201
        %v250 = vunpack.c.l.b16 %v202
        %v251 = vunpack.c.l.b16 %v203
        %v252 = vunpack.c.l.b16 %v204
        %v253 = vpack.c.b16 %v250, %v249
        %v254 = vpack.c.b16 %v252, %v251
        %vm255 = vcmask 31744
        %v257 = vsel %vm255, %v253, 0
        %v260 = vsel %vm255, %v254, 0
        %vm262 = vcmask 1041408
        %v264 = vsel %vm262, %v243, 0
        %v267 = vsel %vm262, %v244, 0
        %269 = vmatprep.subr.bf16.mxu0 0
        %270 = vmatpush1.bf16.msra.mxu0 0
        %271 = vmatprep.subr.bf16.mxu0 0
        %272 = vmatpush1.bf16.msra.mxu0 0
        %273 = vmatprep.subr.bf16.mxu0 0
        %274 = vmatpush1.bf16.msra.mxu0 0
        %275 = vmatprep.subr.bf16.mxu0 0
        %276 = vmatpush1.bf16.msra.mxu0 0
        %277 = vmatprep.subr.bf16.mxu0 0
        %278 = vmatpush1.bf16.msra.mxu0 0
        %279 = vmatprep.subr.bf16.mxu0 0
        %280 = vmatpush1.bf16.msra.mxu0 0
        %281 = vmatprep.subr.bf16.mxu0 0
        %282 = vmatpush1.bf16.msra.mxu0 0
        %283 = vmatprep.subr.bf16.mxu0 %v267
        %284 = vmatpush1.bf16.msra.mxu0 %v264
        %285 = vmatprep.subr.bf16.mxu0 0
        %286 = vmatpush2.bf16.msra.mxu0 0
        %287 = vmatprep.subr.bf16.mxu0 0
        %288 = vmatpush2.bf16.msra.mxu0 0
        %289 = vmatprep.subr.bf16.mxu0 0
        %290 = vmatpush2.bf16.msra.mxu0 0
        %291 = vmatprep.subr.bf16.mxu0 0
        %292 = vmatpush2.bf16.msra.mxu0 0
        %293 = vmatprep.subr.bf16.mxu0 0
        %294 = vmatpush2.bf16.msra.mxu0 0
        %295 = vmatprep.subr.bf16.mxu0 0
        %296 = vmatpush2.bf16.msra.mxu0 0
        %297 = vmatprep.subr.bf16.mxu0 0
        %298 = vmatpush2.bf16.msra.mxu0 0
        %299 = vmatprep.subr.bf16.mxu0 0
        %300 = vmatpush2.bf16.msra.mxu0 0
        %301 = vmatprep.mubr.bf16.mxu0 0
        %302 = vmatmul.mubr.bf16.gmra.mxu0 %v257
        %v303 = vpop.f32.mrf.mxu0
        %v304 = vadd.f32 %v213, %v303
        %v305 = vpop.f32.mrf.mxu0
        %v306 = vadd.f32 %v213, %v305
        %v307 = vpop.f32.mrf.mxu0
        %v308 = vadd.f32 %v218, %v307
        %v309 = vpop.f32.mrf.mxu0
        %v310 = vadd.f32 %v218, %v309
        %311 = vmatprep.mubr.bf16.mxu0 0
        %312 = vmatmul.mubr.bf16.gmra.mxu0 %v260
        %v313 = vpop.f32.mrf.mxu0
        %v314 = vadd.f32 %v223, %v313
        %v315 = vpop.f32.mrf.mxu0
        %v316 = vadd.f32 %v223, %v315
        %v317 = vpop.f32.mrf.mxu0
        %v318 = vadd.f32 %v228, %v317
        %v319 = vpop.f32.mrf.mxu0
        %v320 = vadd.f32 %v228, %v319
        %321 = vdwg.mxu0
        %v322 = vmax.f32 %v304, 0.0
        %v323 = vmax.f32 %v306, 0.0
        %v324 = vmax.f32 %v308, 0.0
        %v325 = vmax.f32 %v310, 0.0
        %v326 = vmax.f32 %v314, 0.0
        %v327 = vmax.f32 %v316, 0.0
        %v328 = vmax.f32 %v318, 0.0
        %v329 = vmax.f32 %v320, 0.0
        %vm330 = vcmask 261120
        %v331 = vsel %vm330, %v205, 0
        %333 = vmatprep.subr.mxu0 0.0
        %334 = vmatpush1.msra.mxu0 0.0
        %335 = vmatprep.subr.mxu0 0.0
        %336 = vmatpush1.msra.mxu0 0.0
        %337 = vmatprep.subr.mxu0 0.0
        %338 = vmatpush1.msra.mxu0 0.0
        %339 = vmatprep.subr.mxu0 0.0
        %340 = vmatpush1.msra.mxu0 0.0
        %341 = vmatprep.subr.mxu0 0.0
        %342 = vmatpush1.msra.mxu0 0.0
        %343 = vmatprep.subr.mxu0 0.0
        %344 = vmatpush1.msra.mxu0 0.0
        %345 = vmatprep.subr.mxu0 0.0
        %346 = vmatpush1.msra.mxu0 0.0
        %347 = vmatprep.subr.mxu0 0.0
        %348 = vmatpush1.msra.mxu0 0.0
        %349 = vmatprep.subr.mxu0 0.0
        %350 = vmatpush1.msra.mxu0 0.0
        %351 = vmatprep.subr.mxu0 0.0
        %352 = vmatpush1.msra.mxu0 0.0
        %353 = vmatprep.subr.mxu0 0.0
        %354 = vmatpush1.msra.mxu0 0.0
        %355 = vmatprep.subr.mxu0 0.0
        %356 = vmatpush1.msra.mxu0 0.0
        %357 = vmatprep.subr.mxu0 %v329
        %358 = vmatpush1.msra.mxu0 %v328
        %359 = vmatprep.subr.mxu0 %v327
        %360 = vmatpush1.msra.mxu0 %v326
        %361 = vmatprep.subr.mxu0 %v325
        %362 = vmatpush1.msra.mxu0 %v324
        %363 = vmatprep.subr.mxu0 %v323
        %364 = vmatpush1.msra.mxu0 %v322
        %365 = vmatprep.subr.mxu0 0.0
        %366 = vmatpush2.msra.mxu0 0.0
        %367 = vmatprep.subr.mxu0 0.0
        %368 = vmatpush2.msra.mxu0 0.0
        %369 = vmatprep.subr.mxu0 0.0
        %370 = vmatpush2.msra.mxu0 0.0
        %371 = vmatprep.subr.mxu0 0.0
        %372 = vmatpush2.msra.mxu0 0.0
        %373 = vmatprep.subr.mxu0 0.0
        %374 = vmatpush2.msra.mxu0 0.0
        %375 = vmatprep.subr.mxu0 0.0
        %376 = vmatpush2.msra.mxu0 0.0
        %377 = vmatprep.subr.mxu0 0.0
        %378 = vmatpush2.msra.mxu0 0.0
        %379 = vmatprep.subr.mxu0 0.0
        %380 = vmatpush2.msra.mxu0 0.0
        %381 = vmatprep.subr.mxu0 0.0
        %382 = vmatpush2.msra.mxu0 0.0
        %383 = vmatprep.subr.mxu0 0.0
        %384 = vmatpush2.msra.mxu0 0.0
        %385 = vmatprep.subr.mxu0 0.0
        %386 = vmatpush2.msra.mxu0 0.0
        %387 = vmatprep.subr.mxu0 0.0
        %388 = vmatpush2.msra.mxu0 0.0
        %389 = vmatprep.subr.mxu0 0.0
        %390 = vmatpush2.msra.mxu0 0.0
        %391 = vmatprep.subr.mxu0 0.0
        %392 = vmatpush2.msra.mxu0 0.0
        %393 = vmatprep.subr.mxu0 0.0
        %394 = vmatpush2.msra.mxu0 0.0
        %395 = vmatprep.subr.mxu0 0.0
        %396 = vmatpush2.msra.mxu0 0.0
        %397 = vmatprep.mubr.f32.mxu0 0.0
        %398 = vmatmul.mubr.f32.gmra.mxu0 %v331
        %v399 = vpop.f32.mrf.mxu0
        %v400 = vadd.f32 %v238, %v399
        %v401 = vpop.f32.mrf.mxu0
        %v402 = vadd.f32 %v238, %v401
        %403 = vdwg.mxu0
        %v404 = vsub.f32 0.0, %v400
        %v405 = vsub.f32 0.0, %v402
        %v406 = vmul.f32 %v404, 1.442695
        %v407 = vpow.pop %v406
        %v408 = vmul.f32 %v405, 1.442695
        %v409 = vpow.pop %v408
        %v410 = vadd.f32 %v407, 1.0
        %v411 = vadd.f32 %v409, 1.0
        %v412 = vrcp.pop %v410
        %v413 = vrcp.pop %v411
        %v416 = vcombine.low %v412, %v413
        %v418 = vunpack.c.l.s4 1966171168
        %v419 = vunpack.c.0.s8 %v418
        %v420 = vlaneseq
        %v421 = vshrl.u32 %v420, 7
        %v422 = vsub.s32 %v419, %v421
        %v423 = vrot.slane %v416, %v422
        %v425 = vunpack.c.l.s4 1966171168
        %v426 = vunpack.c.0.s8 %v425
        %v427 = vlaneseq
        %v428 = vshrl.u32 %v427, 7
        %v429 = vsub.s32 %v426, %v428
        %v430 = vrot.slane %v423, %v429
        %v432 = vlaneseq
        %vm433 = vcmp.ge.s32.totalorder %v432, 0
        %vm434 = vcmp.lt.s32.totalorder %v432, 256
        %vm435 = vmand %vm433, %vm434
        %436 = vst.msk [vmem:[%s188] sm:$0x3] %vm435, %v430
        %s437 = sand.u32 %s109, 1
        %s438 = scalar_lea.sflag [#allocation3], %s437
        %s439 = sand.u32 %s109, 1
        %s440 = smul.addr %s439, 2
        %s441 = scalar_lea.vmem [#allocation2], %s440
        // Predicated region
        $region33: #{tpu_custom_call.1} parent=31 // pred_check
          %p442 = pneg %p119
        $region34: #{tpu_custom_call.1} parent=31 // pred_check_branch
          %444 = sbr.rel (%p442) target = $region36
        $region35: #{tpu_custom_call.1} parent=31 // pred_region
          %s445 = smul.u32 2, %s22
          %s447 = ssub.s32 32, 32
          %448 = vsyncadd %s438, %s447
          %s449 = smul.addr %s21, 2
          %s450 = sadd.s32 %s445, %s449
          %s451 = smul.addr %s450, 16
          %s452 = scalar_lea.hbm %s3, %s451
          %s454 = sshll.u32 %s441, 4
          %s455 = int_to_ptr.vmem [resolvable:$true] %s454
          %457 = dma.vmem_to_hbm [thread:$0]  %s455, 32, %s452, %s438
        $region36: #{tpu_custom_call.1} parent=31 // pred_fallthru
          _
      $region32: #{tpu_custom_call.1} parent=5 // pred_fallthru
        _
      %p458 = scmp.le.s32.totalorder 2, %s12
      // Predicated region
      $region37: #{tpu_custom_call.1} parent=5 // pred_check
        %p459 = pneg %p458
      $region38: #{tpu_custom_call.1} parent=5 // pred_check_branch
        %461 = sbr.rel (%p459) target = $region40
      $region39: #{tpu_custom_call.1} parent=5 // pred_region
        %s462 = ssub.s32 %s12, 2
        // Predicated region
        $region41: #{tpu_custom_call.1} parent=39 // pred_check
          %p463 = pneg %p125
        $region42: #{tpu_custom_call.1} parent=39 // pred_check_branch
          %465 = sbr.rel (%p463) target = $region44
        $region43: #{tpu_custom_call.1} parent=39 // pred_region
          %s466 = sand.u32 %s110, 1
          %s467 = scalar_lea.sflag [#allocation3], %s466
          %s468 = sand.u32 %s110, 1
          %s469 = smul.addr %s468, 2
          %s470 = scalar_lea.vmem [#allocation2], %s469
          %471 = dma.done %s467, 32
        $region44: #{tpu_custom_call.1} parent=39 // pred_fallthru
          _
      $region40: #{tpu_custom_call.1} parent=5 // pred_fallthru
        _
    $region6: #{tpu_custom_call.1} parent=1 // loop_footer
      %s16 = sadd.s32 1, %s12
    $region7: #{tpu_custom_call.1} parent=1 // loop_footer_branch
      %11 = sbr.rel target = $region3
    $region8: #{tpu_custom_call.1} parent=1 // loop_exit
      _
    %472 = vsyncpa [#allocation3], 1
    %s473 = scalar_lea.sflag [#allocation3], 1
    %474 = vsyncpa %s473, 1

</llo_original>
